<compile_context>
chip_gen: v5e
topology: v5e:2x2
jax: 0.10.0
libtpu: 0.0.40
codegen_flags: <defaults>
</compile_context>

<pallas_src>
import functools

import jax
import jax.numpy as jnp
from jax.experimental import pallas as pl
from jax.experimental.pallas import tpu as pltpu


def _lstm_recurrence_kernel(t_valid, t_total,
                            x_ref, wih_ref, whh_ref, bias_ref,
                            hout_ref, pg_sc, h_sc, c_sc):
    """One grid step == (batch tile, time chunk); recurrence runs in-register."""
    chunk = pl.program_id(1)

    @pl.when(chunk == 0)
    def _():
        h_sc[...] = jnp.zeros_like(h_sc)
        c_sc[...] = jnp.zeros_like(c_sc)

    tchunk, tb, _ = x_ref.shape
    g4 = whh_ref.shape[1]
    h_dim = g4 // 4
    needs_mask = (t_total != t_valid)          # Python bool, decided at trace time

    # Hoisted out of both loops (JAX does not CSE broadcast_in_dim).
    wih = wih_ref[...]                                         # (E, 4H) bf16
    whh = whh_ref[...]                                         # (H, 4H) bf16
    bias = bias_ref[...]                                       # (1, 4H) f32
    lane = jax.lax.broadcasted_iota(jnp.int32, (tb, g4), 1)
    is_g = jnp.logical_and(lane >= 2 * h_dim, lane < 3 * h_dim)
    # Single-tanh gate activation: sigmoid(x) = 0.5*tanh(0.5*x) + 0.5 on the
    # i/f/o lanes, plain tanh on the g lanes (PyTorch gate order i,f,g,o).
    pre_s = jnp.where(is_g, jnp.float32(1.0), jnp.float32(0.5))
    post_m = pre_s
    post_a = jnp.where(is_g, jnp.float32(0.0), jnp.float32(0.5))

    # ---- (1) input projection for the whole chunk, off the serial path -----
    @pl.loop(0, tchunk)
    def _(t):
        pg_sc[t] = (jnp.dot(x_ref[t], wih, preferred_element_type=jnp.float32)
                    + bias)

    # ---- (2) serial recurrence over the chunk, h/c carried in registers ----
    def step(t, carry):
        h, c = carry
        # Exactly one matmul on the dependence chain: h_{t-1} @ W_hh^T.
        gates = pg_sc[t] + jnp.dot(h.astype(jnp.bfloat16), whh,
                                   preferred_element_type=jnp.float32)
        act = jnp.tanh(gates * pre_s) * post_m + post_a
        # TODO(synk): with H < 128 these are within-vreg lane extracts; if the
        # bundle dump shows XLU shuffles on the critical path, emit gates as
        # (4, B, H) from the glue / weight layout instead.
        i_g = act[:, 0 * h_dim:1 * h_dim]
        f_g = act[:, 1 * h_dim:2 * h_dim]
        g_g = act[:, 2 * h_dim:3 * h_dim]
        o_g = act[:, 3 * h_dim:4 * h_dim]
        c_new = f_g * c + i_g * g_g
        h_new = o_g * jnp.tanh(c_new)
        if needs_mask:                         # only emitted when T was padded
            valid = (chunk * tchunk + t) < t_valid
            h_new = jnp.where(valid, h_new, h)
            c_new = jnp.where(valid, c_new, c)
        return h_new, c_new

    unroll = int(tchunk) if tchunk <= 8 else 8     # bounded vreg pressure
    h_fin, c_fin = jax.lax.fori_loop(0, tchunk, step, (h_sc[...], c_sc[...]),
                                     unroll=unroll)
    h_sc[...] = h_fin
    c_sc[...] = c_fin
    # Resident output block (constant index over the time axis): write every
    # chunk so it is never left uninitialized; last chunk's write wins.
    hout_ref[...] = h_fin


def _vmem_budget_bytes():
    """Conservative per-kernel VMEM budget derived from the actual chip."""
    try:
        cap = int(getattr(pltpu.get_tpu_info(), "vmem_capacity_bytes",
                          64 * 1024 * 1024))
    except Exception:
        cap = 64 * 1024 * 1024                 # v7x-safe fallback
    return min(cap * 3 // 4, 100 * 1024 * 1024)


def _pick_time_chunk(T, tb, E, H, budget_bytes):
    """Biggest time chunk whose working set fits the VMEM budget."""
    g4 = 4 * H
    per_step = 2 * tb * E * 2 + tb * g4 * 4    # 2x-buffered bf16 x + f32 pg scratch
    resident = ((E + H) * g4 * 2               # W_ih^T + W_hh^T (bf16)
                + g4 * 4                       # combined bias
                + 3 * tb * H * 4)              # h/c scratch + resident output
    avail = budget_bytes - resident - (2 << 20)    # slack for compiler scratch
    return int(max(1, min(avail // per_step, T, 512)))


def lstm_classifier_forward(x_tokens, params, time_chunk=None):
    """Equivalent of LSTMClassifier.forward(x_tokens)."""
    emb_table = params["embedding"]            # (V, E), row 0 zeroed (padding_idx=0)
    w_ih = params["w_ih"]                      # (4H, E)   PyTorch layout
    w_hh = params["w_hh"]                      # (4H, H)
    b_ih = params["b_ih"]                      # (4H,)
    b_hh = params["b_hh"]                      # (4H,)
    w_fc = params["w_fc"]                      # (O, H)
    b_fc = params["b_fc"]                      # (O,)

    B, T = x_tokens.shape
    E = w_ih.shape[1]
    H = w_hh.shape[1]
    G4 = 4 * H

    # Batch padding fills sublanes; a 2-way "parallel" batch split gives the
    # second v7x TensorCore work (harmless on single-TC v5e/v6e).
    B_pad = ((B + 7) // 8) * 8
    n_btiles = 2 if (B_pad >= 16 and B_pad % 16 == 0) else 1
    tb = B_pad // n_btiles

    budget = _vmem_budget_bytes()
    if time_chunk is None:
        time_chunk = _pick_time_chunk(T, tb, E, H, budget)
    time_chunk = max(1, min(int(time_chunk), T))
    n_chunks = pl.cdiv(T, time_chunk)
    T_pad = n_chunks * time_chunk              # pad + mask instead of chunk=1

    # ---- glue: embedding gather + layout/padding (not the recurrent path) ----
    embedded = jnp.take(emb_table, x_tokens, axis=0)            # (B, T, E) f32
    x_tbe = jnp.transpose(embedded, (1, 0, 2))                  # (T, B, E)
    x_tbe = jnp.pad(x_tbe, ((0, T_pad - T), (0, B_pad - B), (0, 0)))
    x_tbe = x_tbe.astype(jnp.bfloat16)                          # halve HBM stream
    wih_t = jnp.transpose(w_ih).astype(jnp.bfloat16)            # (E, 4H)
    whh_t = jnp.transpose(w_hh).astype(jnp.bfloat16)            # (H, 4H)
    bias = (b_ih + b_hh).astype(jnp.float32).reshape(1, G4)

    kernel = functools.partial(_lstm_recurrence_kernel, int(T), int(T_pad))

    grid_spec = pltpu.PrefetchScalarGridSpec(
        num_scalar_prefetch=0,
        grid=(n_btiles, n_chunks),
        in_specs=[
            # Streamed bf16 embedded chunk, auto double-buffered.
            pl.BlockSpec((time_chunk, tb, E), lambda b, t: (t, b, 0)),
            # Constant weights/bias: single resident VMEM copy each.
            pl.BlockSpec(memory_space=pltpu.MemorySpace.VMEM),
            pl.BlockSpec(memory_space=pltpu.MemorySpace.VMEM),
            pl.BlockSpec(memory_space=pltpu.MemorySpace.VMEM),
        ],
        out_specs=pl.BlockSpec((tb, H), lambda b, t: (b, 0)),    # resident h_T
        scratch_shapes=[
            pltpu.VMEM((time_chunk, tb, G4), jnp.float32),       # chunk pre-gates
            pltpu.VMEM((tb, H), jnp.float32),                    # h carry
            pltpu.VMEM((tb, H), jnp.float32),                    # c carry
        ],
    )

    h_last = pl.pallas_call(
        kernel,
        out_shape=jax.ShapeDtypeStruct((B_pad, H), jnp.float32),
        grid_spec=grid_spec,
        compiler_params=pltpu.CompilerParams(
            dimension_semantics=("parallel", "arbitrary"),
            vmem_limit_bytes=int(budget),
        ),
    )(x_tbe, wih_t, whh_t, bias)

    # Tiny FC (H -> O) in plain JAX on the unpadded rows: keeps the kernel
    # output lane-dense and frees W_fc / b_fc VMEM residency.
    return h_last[:B] @ jnp.transpose(w_fc) + b_fc[None, :]


def _reference_forward(x_tokens, params):
    """Pure-JAX f32 reference replicating PyTorch LSTMClassifier semantics."""
    emb = jnp.take(params["embedding"], x_tokens, axis=0)        # (B, T, E)
    H = params["w_hh"].shape[1]
    B = x_tokens.shape[0]

    def step(carry, x_t):
        h, c = carry
        gates = (x_t @ params["w_ih"].T + params["b_ih"]
                 + h @ params["w_hh"].T + params["b_hh"])
        i = jax.nn.sigmoid(gates[:, 0 * H:1 * H])
        f = jax.nn.sigmoid(gates[:, 1 * H:2 * H])
        g = jnp.tanh(gates[:, 2 * H:3 * H])
        o = jax.nn.sigmoid(gates[:, 3 * H:4 * H])
        c = f * c + i * g
        h = o * jnp.tanh(c)
        return (h, c), None

    h0 = jnp.zeros((B, H), jnp.float32)
    (h, _), _ = jax.lax.scan(step, (h0, h0), jnp.transpose(emb, (1, 0, 2)))
    return h @ params["w_fc"].T + params["b_fc"]


def make_params(key, vocab_size, embed_dim, hidden_dim, output_dim):
    ks = jax.random.split(key, 7)
    s = 1.0 / jnp.sqrt(hidden_dim)
    emb = jax.random.normal(ks[0], (vocab_size, embed_dim), jnp.float32)
    emb = emb.at[0].set(0.0)                                     # padding_idx=0
    return {
        "embedding": emb,
        "w_ih": jax.random.uniform(ks[1], (4 * hidden_dim, embed_dim),
                                   jnp.float32, -s, s),
        "w_hh": jax.random.uniform(ks[2], (4 * hidden_dim, hidden_dim),
                                   jnp.float32, -s, s),
        "b_ih": jax.random.uniform(ks[3], (4 * hidden_dim,), jnp.float32, -s, s),
        "b_hh": jax.random.uniform(ks[4], (4 * hidden_dim,), jnp.float32, -s, s),
        "w_fc": jax.random.uniform(ks[5], (output_dim, hidden_dim),
                                   jnp.float32, -s, s),
        "b_fc": jax.random.uniform(ks[6], (output_dim,), jnp.float32, -s, s),
    }


if __name__ == "__main__":
    VOCAB, EMBED, HIDDEN, OUT = 50, 32, 32, 4
    BATCH, SEQ = 2, 8

    key = jax.random.PRNGKey(0)
    k_param, k_tok = jax.random.split(key)
    params = make_params(k_param, VOCAB, EMBED, HIDDEN, OUT)
    x_tokens = jax.random.randint(k_tok, (BATCH, SEQ), 0, VOCAB, dtype=jnp.int32)

    ref = jax.block_until_ready(_reference_forward(x_tokens, params))

    # (a) multi-chunk path: time_chunk=4 -> 2 grid steps, exercises the
    #     resident h/c carry across chunks.
    logits = jax.block_until_ready(
        lstm_classifier_forward(x_tokens, params, time_chunk=4))
    assert logits.shape == (BATCH, OUT)
    # bf16 input/recurrent weights with f32 accumulation vs. a pure-f32
    # reference: ~1e-3..1e-2 error at these magnitudes.
    assert jnp.allclose(logits, ref, atol=2e-2, rtol=2e-2)

    # (b) ragged path: T=8 not divisible by 3 -> padded time axis + per-step
    #     validity mask inside the kernel.
    logits_ragged = jax.block_until_ready(
        lstm_classifier_forward(x_tokens, params, time_chunk=3))
    assert jnp.allclose(logits_ragged, ref, atol=2e-2, rtol=2e-2)

    # (c) auto-sized chunk from the queried VMEM budget.
    logits_auto = jax.block_until_ready(lstm_classifier_forward(x_tokens, params))
    assert jnp.allclose(logits_auto, ref, atol=2e-2, rtol=2e-2)

    print("KERNEL_OK")
</pallas_src>

<mosaic_0001>
module attributes {stable_mosaic.version = 11 : i64} {
  func.func @_lstm_recurrence_kernel(%arg0: i32, %arg1: i32, %arg2: memref<4x8x32xbf16, #tpu.memory_space<vmem>>, %arg3: memref<32x128xbf16, #tpu.memory_space<vmem>>, %arg4: memref<32x128xbf16, #tpu.memory_space<vmem>>, %arg5: memref<1x128xf32, #tpu.memory_space<vmem>>, %arg6: memref<8x32xf32, #tpu.memory_space<vmem>>, %arg7: memref<4x8x128xf32, #tpu.memory_space<vmem>>, %arg8: memref<8x32xf32, #tpu.memory_space<vmem>>, %arg9: memref<8x32xf32, #tpu.memory_space<vmem>>) attributes {dimension_semantics = [#tpu.dimension_semantics<parallel>, #tpu.dimension_semantics<arbitrary>], iteration_bounds = array<i64: 1, 2>, scalar_prefetch = 0 : i64, scratch_operands = 3 : i64, tpu.core_type = #tpu.core_type<tc>, window_params = [{transform_indices = @transform_0, window_bounds = array<i64: 4, 8, 32>}, {pipeline_mode = #tpu.pipeline_mode<synchronous>, transform_indices = @transform_1, window_bounds = array<i64: 32, 128>}, {pipeline_mode = #tpu.pipeline_mode<synchronous>, transform_indices = @transform_2, window_bounds = array<i64: 32, 128>}, {pipeline_mode = #tpu.pipeline_mode<synchronous>, transform_indices = @transform_3, window_bounds = array<i64: 1, 128>}, {transform_indices = @transform_4, window_bounds = array<i64: 8, 32>}]} {
    %c0_i32 = arith.constant 0 : i32
    %0 = arith.cmpi eq, %arg1, %c0_i32 : i32
    %1 = arith.extui %0 : i1 to i32
    %c0_i32_0 = arith.constant 0 : i32
    %2 = arith.cmpi ne, %1, %c0_i32_0 : i32
    scf.if %2 {
      %cst_36 = arith.constant 0.000000e+00 : f32
      %100 = vector.broadcast %cst_36 : f32 to vector<8x32xf32>
      %c0_37 = arith.constant 0 : index
      %c0_38 = arith.constant 0 : index
      %101 = vector.load %arg8[%c0_37, %c0_38] : memref<8x32xf32, #tpu.memory_space<vmem>>, vector<8x32xf32>
      tpu.vector_store %arg8[%c0_37, %c0_38], %100 {strides = array<i32>} : memref<8x32xf32, #tpu.memory_space<vmem>>, vector<8x32xf32>,
      %cst_39 = arith.constant 0.000000e+00 : f32
      %102 = vector.broadcast %cst_39 : f32 to vector<8x32xf32>
      %c0_40 = arith.constant 0 : index
      %c0_41 = arith.constant 0 : index
      %103 = vector.load %arg9[%c0_40, %c0_41] : memref<8x32xf32, #tpu.memory_space<vmem>>, vector<8x32xf32>
      tpu.vector_store %arg9[%c0_40, %c0_41], %102 {strides = array<i32>} : memref<8x32xf32, #tpu.memory_space<vmem>>, vector<8x32xf32>,
    } else {
    }
    %c0 = arith.constant 0 : index
    %c0_1 = arith.constant 0 : index
    %3 = vector.load %arg3[%c0, %c0_1] : memref<32x128xbf16, #tpu.memory_space<vmem>>, vector<32x128xbf16>
    %c0_2 = arith.constant 0 : index
    %c0_3 = arith.constant 0 : index
    %4 = vector.load %arg4[%c0_2, %c0_3] : memref<32x128xbf16, #tpu.memory_space<vmem>>, vector<32x128xbf16>
    %c0_4 = arith.constant 0 : index
    %c0_5 = arith.constant 0 : index
    %5 = vector.load %arg5[%c0_4, %c0_5] : memref<1x128xf32, #tpu.memory_space<vmem>>, vector<1x128xf32>
    %6 = tpu.iota {dimensions = array<i32: 1>} : vector<8x128xi32>
    %c64_i32 = arith.constant 64 : i32
    %7 = vector.broadcast %c64_i32 : i32 to vector<8x128xi32>
    %8 = arith.cmpi sge, %6, %7 : vector<8x128xi32>
    %c96_i32 = arith.constant 96 : i32
    %9 = vector.broadcast %c96_i32 : i32 to vector<8x128xi32>
    %10 = arith.cmpi slt, %6, %9 : vector<8x128xi32>
    %11 = arith.andi %8, %10 : vector<8x128xi1>
    %cst = arith.constant 1.000000e+00 : f32
    %cst_6 = arith.constant 5.000000e-01 : f32
    %12 = vector.broadcast %cst : f32 to vector<8x128xf32>
    %13 = vector.broadcast %cst_6 : f32 to vector<8x128xf32>
    %14 = arith.select %11, %12, %13 : vector<8x128xi1>, vector<8x128xf32>
    %cst_7 = arith.constant 0.000000e+00 : f32
    %cst_8 = arith.constant 5.000000e-01 : f32
    %15 = vector.broadcast %cst_7 : f32 to vector<8x128xf32>
    %16 = vector.broadcast %cst_8 : f32 to vector<8x128xf32>
    %17 = arith.select %11, %15, %16 : vector<8x128xi1>, vector<8x128xf32>
    %c0_i32_9 = arith.constant 0 : i32
    %c4_i32 = arith.constant 4 : i32
    %18 = arith.addi %c0_i32_9, %c4_i32 : i32
    %c1_i32 = arith.constant 1 : i32
    scf.for %arg10 = %c0_i32_9 to %18 step %c1_i32  : i32 {
      %c1_i32_36 = arith.constant 1 : i32
      %100 = arith.muli %arg10, %c1_i32_36 : i32
      %c0_i32_37 = arith.constant 0 : i32
      %101 = arith.addi %c0_i32_37, %100 : i32
      %102 = arith.index_cast %101 : i32 to index
      %c0_38 = arith.constant 0 : index
      %c0_39 = arith.constant 0 : index
      %103 = vector.load %arg2[%102, %c0_38, %c0_39] : memref<4x8x32xbf16, #tpu.memory_space<vmem>>, vector<1x8x32xbf16>
      %104 = vector.shape_cast %103 : vector<1x8x32xbf16> to vector<8x32xbf16>
      %cst_40 = arith.constant dense<0.000000e+00> : vector<8x128xf32>
      %105 = tpu.matmul %104, %3, %cst_40 {dimension_numbers = #tpu.dot_dimension_numbers<[1], [0], [0], [1], [0, 0, 1, 1], [], []>} : vector<8x32xbf16>, vector<32x128xbf16>, vector<8x128xf32> -> vector<8x128xf32>
      %106 = vector.broadcast %5 : vector<1x128xf32> to vector<8x128xf32>
      %107 = arith.addf %105, %106 : vector<8x128xf32>
      %108 = arith.index_cast %101 : i32 to index
      %c0_41 = arith.constant 0 : index
      %c0_42 = arith.constant 0 : index
      %109 = vector.load %arg7[%108, %c0_41, %c0_42] : memref<4x8x128xf32, #tpu.memory_space<vmem>>, vector<1x8x128xf32>
      %110 = vector.shape_cast %109 : vector<1x8x128xf32> to vector<8x128xf32>
      %111 = vector.shape_cast %107 : vector<8x128xf32> to vector<1x8x128xf32>
      tpu.vector_store %arg7[%108, %c0_41, %c0_42], %111 {strides = array<i32>} : memref<4x8x128xf32, #tpu.memory_space<vmem>>, vector<1x8x128xf32>,
    }
    %c4_i32_10 = arith.constant 4 : i32
    %c0_11 = arith.constant 0 : index
    %c0_12 = arith.constant 0 : index
    %19 = vector.load %arg8[%c0_11, %c0_12] : memref<8x32xf32, #tpu.memory_space<vmem>>, vector<8x32xf32>
    %c0_13 = arith.constant 0 : index
    %c0_14 = arith.constant 0 : index
    %20 = vector.load %arg9[%c0_13, %c0_14] : memref<8x32xf32, #tpu.memory_space<vmem>>, vector<8x32xf32>
    %c0_i32_15 = arith.constant 0 : i32
    %21 = arith.index_cast %c0_i32_15 : i32 to index
    %c0_16 = arith.constant 0 : index
    %c0_17 = arith.constant 0 : index
    %22 = vector.load %arg7[%21, %c0_16, %c0_17] : memref<4x8x128xf32, #tpu.memory_space<vmem>>, vector<1x8x128xf32>
    %23 = vector.shape_cast %22 : vector<1x8x128xf32> to vector<8x128xf32>
    %24 = arith.truncf %19 : vector<8x32xf32> to vector<8x32xbf16>
    %cst_18 = arith.constant dense<0.000000e+00> : vector<8x128xf32>
    %25 = tpu.matmul %24, %4, %cst_18 {dimension_numbers = #tpu.dot_dimension_numbers<[1], [0], [0], [1], [0, 0, 1, 1], [], []>} : vector<8x32xbf16>, vector<32x128xbf16>, vector<8x128xf32> -> vector<8x128xf32>
    %26 = arith.addf %23, %25 : vector<8x128xf32>
    %27 = arith.mulf %26, %14 : vector<8x128xf32>
    %28 = math.tanh %27 : vector<8x128xf32>
    %29 = arith.mulf %28, %14 : vector<8x128xf32>
    %30 = arith.addf %29, %17 : vector<8x128xf32>
    %31 = vector.extract_strided_slice %30 {offsets = [0, 0], sizes = [8, 32], strides = [1, 1]} : vector<8x128xf32> to vector<8x32xf32>
    %32 = vector.extract_strided_slice %30 {offsets = [0, 32], sizes = [8, 32], strides = [1, 1]} : vector<8x128xf32> to vector<8x32xf32>
    %33 = vector.extract_strided_slice %30 {offsets = [0, 64], sizes = [8, 32], strides = [1, 1]} : vector<8x128xf32> to vector<8x32xf32>
    %34 = vector.extract_strided_slice %30 {offsets = [0, 96], sizes = [8, 32], strides = [1, 1]} : vector<8x128xf32> to vector<8x32xf32>
    %35 = arith.mulf %32, %20 : vector<8x32xf32>
    %36 = arith.mulf %31, %33 : vector<8x32xf32>
    %37 = arith.addf %35, %36 : vector<8x32xf32>
    %38 = math.tanh %37 : vector<8x32xf32>
    %39 = arith.mulf %34, %38 : vector<8x32xf32>
    %c1_i32_19 = arith.constant 1 : i32
    %40 = arith.index_cast %c1_i32_19 : i32 to index
    %c0_20 = arith.constant 0 : index
    %c0_21 = arith.constant 0 : index
    %41 = vector.load %arg7[%40, %c0_20, %c0_21] : memref<4x8x128xf32, #tpu.memory_space<vmem>>, vector<1x8x128xf32>
    %42 = vector.shape_cast %41 : vector<1x8x128xf32> to vector<8x128xf32>
    %43 = arith.truncf %39 : vector<8x32xf32> to vector<8x32xbf16>
    %cst_22 = arith.constant dense<0.000000e+00> : vector<8x128xf32>
    %44 = tpu.matmul %43, %4, %cst_22 {dimension_numbers = #tpu.dot_dimension_numbers<[1], [0], [0], [1], [0, 0, 1, 1], [], []>} : vector<8x32xbf16>, vector<32x128xbf16>, vector<8x128xf32> -> vector<8x128xf32>
    %45 = arith.addf %42, %44 : vector<8x128xf32>
    %46 = arith.mulf %45, %14 : vector<8x128xf32>
    %47 = math.tanh %46 : vector<8x128xf32>
    %48 = arith.mulf %47, %14 : vector<8x128xf32>
    %49 = arith.addf %48, %17 : vector<8x128xf32>
    %50 = vector.extract_strided_slice %49 {offsets = [0, 0], sizes = [8, 32], strides = [1, 1]} : vector<8x128xf32> to vector<8x32xf32>
    %51 = vector.extract_strided_slice %49 {offsets = [0, 32], sizes = [8, 32], strides = [1, 1]} : vector<8x128xf32> to vector<8x32xf32>
    %52 = vector.extract_strided_slice %49 {offsets = [0, 64], sizes = [8, 32], strides = [1, 1]} : vector<8x128xf32> to vector<8x32xf32>
    %53 = vector.extract_strided_slice %49 {offsets = [0, 96], sizes = [8, 32], strides = [1, 1]} : vector<8x128xf32> to vector<8x32xf32>
    %54 = arith.mulf %51, %37 : vector<8x32xf32>
    %55 = arith.mulf %50, %52 : vector<8x32xf32>
    %56 = arith.addf %54, %55 : vector<8x32xf32>
    %57 = math.tanh %56 : vector<8x32xf32>
    %58 = arith.mulf %53, %57 : vector<8x32xf32>
    %c2_i32 = arith.constant 2 : i32
    %59 = arith.index_cast %c2_i32 : i32 to index
    %c0_23 = arith.constant 0 : index
    %c0_24 = arith.constant 0 : index
    %60 = vector.load %arg7[%59, %c0_23, %c0_24] : memref<4x8x128xf32, #tpu.memory_space<vmem>>, vector<1x8x128xf32>
    %61 = vector.shape_cast %60 : vector<1x8x128xf32> to vector<8x128xf32>
    %62 = arith.truncf %58 : vector<8x32xf32> to vector<8x32xbf16>
    %cst_25 = arith.constant dense<0.000000e+00> : vector<8x128xf32>
    %63 = tpu.matmul %62, %4, %cst_25 {dimension_numbers = #tpu.dot_dimension_numbers<[1], [0], [0], [1], [0, 0, 1, 1], [], []>} : vector<8x32xbf16>, vector<32x128xbf16>, vector<8x128xf32> -> vector<8x128xf32>
    %64 = arith.addf %61, %63 : vector<8x128xf32>
    %65 = arith.mulf %64, %14 : vector<8x128xf32>
    %66 = math.tanh %65 : vector<8x128xf32>
    %67 = arith.mulf %66, %14 : vector<8x128xf32>
    %68 = arith.addf %67, %17 : vector<8x128xf32>
    %69 = vector.extract_strided_slice %68 {offsets = [0, 0], sizes = [8, 32], strides = [1, 1]} : vector<8x128xf32> to vector<8x32xf32>
    %70 = vector.extract_strided_slice %68 {offsets = [0, 32], sizes = [8, 32], strides = [1, 1]} : vector<8x128xf32> to vector<8x32xf32>
    %71 = vector.extract_strided_slice %68 {offsets = [0, 64], sizes = [8, 32], strides = [1, 1]} : vector<8x128xf32> to vector<8x32xf32>
    %72 = vector.extract_strided_slice %68 {offsets = [0, 96], sizes = [8, 32], strides = [1, 1]} : vector<8x128xf32> to vector<8x32xf32>
    %73 = arith.mulf %70, %56 : vector<8x32xf32>
    %74 = arith.mulf %69, %71 : vector<8x32xf32>
    %75 = arith.addf %73, %74 : vector<8x32xf32>
    %76 = math.tanh %75 : vector<8x32xf32>
    %77 = arith.mulf %72, %76 : vector<8x32xf32>
    %c3_i32 = arith.constant 3 : i32
    %78 = arith.index_cast %c3_i32 : i32 to index
    %c0_26 = arith.constant 0 : index
    %c0_27 = arith.constant 0 : index
    %79 = vector.load %arg7[%78, %c0_26, %c0_27] : memref<4x8x128xf32, #tpu.memory_space<vmem>>, vector<1x8x128xf32>
    %80 = vector.shape_cast %79 : vector<1x8x128xf32> to vector<8x128xf32>
    %81 = arith.truncf %77 : vector<8x32xf32> to vector<8x32xbf16>
    %cst_28 = arith.constant dense<0.000000e+00> : vector<8x128xf32>
    %82 = tpu.matmul %81, %4, %cst_28 {dimension_numbers = #tpu.dot_dimension_numbers<[1], [0], [0], [1], [0, 0, 1, 1], [], []>} : vector<8x32xbf16>, vector<32x128xbf16>, vector<8x128xf32> -> vector<8x128xf32>
    %83 = arith.addf %80, %82 : vector<8x128xf32>
    %84 = arith.mulf %83, %14 : vector<8x128xf32>
    %85 = math.tanh %84 : vector<8x128xf32>
    %86 = arith.mulf %85, %14 : vector<8x128xf32>
    %87 = arith.addf %86, %17 : vector<8x128xf32>
    %88 = vector.extract_strided_slice %87 {offsets = [0, 0], sizes = [8, 32], strides = [1, 1]} : vector<8x128xf32> to vector<8x32xf32>
    %89 = vector.extract_strided_slice %87 {offsets = [0, 32], sizes = [8, 32], strides = [1, 1]} : vector<8x128xf32> to vector<8x32xf32>
    %90 = vector.extract_strided_slice %87 {offsets = [0, 64], sizes = [8, 32], strides = [1, 1]} : vector<8x128xf32> to vector<8x32xf32>
    %91 = vector.extract_strided_slice %87 {offsets = [0, 96], sizes = [8, 32], strides = [1, 1]} : vector<8x128xf32> to vector<8x32xf32>
    %92 = arith.mulf %89, %75 : vector<8x32xf32>
    %93 = arith.mulf %88, %90 : vector<8x32xf32>
    %94 = arith.addf %92, %93 : vector<8x32xf32>
    %95 = math.tanh %94 : vector<8x32xf32>
    %96 = arith.mulf %91, %95 : vector<8x32xf32>
    %c4_i32_29 = arith.constant 4 : i32
    %c0_30 = arith.constant 0 : index
    %c0_31 = arith.constant 0 : index
    %97 = vector.load %arg8[%c0_30, %c0_31] : memref<8x32xf32, #tpu.memory_space<vmem>>, vector<8x32xf32>
    tpu.vector_store %arg8[%c0_30, %c0_31], %96 {strides = array<i32>} : memref<8x32xf32, #tpu.memory_space<vmem>>, vector<8x32xf32>,
    %c0_32 = arith.constant 0 : index
    %c0_33 = arith.constant 0 : index
    %98 = vector.load %arg9[%c0_32, %c0_33] : memref<8x32xf32, #tpu.memory_space<vmem>>, vector<8x32xf32>
    tpu.vector_store %arg9[%c0_32, %c0_33], %94 {strides = array<i32>} : memref<8x32xf32, #tpu.memory_space<vmem>>, vector<8x32xf32>,
    %c0_34 = arith.constant 0 : index
    %c0_35 = arith.constant 0 : index
    %99 = vector.load %arg6[%c0_34, %c0_35] : memref<8x32xf32, #tpu.memory_space<vmem>>, vector<8x32xf32>
    tpu.vector_store %arg6[%c0_34, %c0_35], %96 {strides = array<i32>} : memref<8x32xf32, #tpu.memory_space<vmem>>, vector<8x32xf32>,
    return
  }
  func.func @transform_0(%arg0: i32, %arg1: i32) -> (i32, i32, i32) {
    %c0_i32 = arith.constant 0 : i32
    %c0_i32_0 = arith.constant 0 : i32
    return %arg1, %arg0, %c0_i32 : i32, i32, i32
  }
  func.func @transform_1(%arg0: i32, %arg1: i32) -> (i32, i32) {
    %c0_i32 = arith.constant 0 : i32
    %c0_i32_0 = arith.constant 0 : i32
    %c0_i32_1 = arith.constant 0 : i32
    return %c0_i32, %c0_i32_0 : i32, i32
  }
  func.func @transform_2(%arg0: i32, %arg1: i32) -> (i32, i32) {
    %c0_i32 = arith.constant 0 : i32
    %c0_i32_0 = arith.constant 0 : i32
    %c0_i32_1 = arith.constant 0 : i32
    return %c0_i32, %c0_i32_0 : i32, i32
  }
  func.func @transform_3(%arg0: i32, %arg1: i32) -> (i32, i32) {
    %c0_i32 = arith.constant 0 : i32
    %c0_i32_0 = arith.constant 0 : i32
    %c0_i32_1 = arith.constant 0 : i32
    return %c0_i32, %c0_i32_0 : i32, i32
  }
  func.func @transform_4(%arg0: i32, %arg1: i32) -> (i32, i32) {
    %c0_i32 = arith.constant 0 : i32
    %c0_i32_0 = arith.constant 0 : i32
    return %arg0, %c0_i32 : i32, i32
  }
}

</mosaic_0001>

<llo_original>
// kernel: tpu_custom_call.1
$region0: #{tpu_custom_call.1}
  #allocation0 [shape = 'u32[]', space=smem, size = 0x4, offset = 0x4, fixed_abs, tag = 'smem constant byte address 0x4 - core index']
  #allocation1 [shape = 'u32[72,128]{1,0:T(1,128)}', space=vmem, size = 0x9000, scoped, tag = 'internal scratch']
  #allocation2 [shape = 'f32[4,8,128]{2,1,0:T(8,128)}', space=vmem, size = 0x4000, scoped, tag = 'scratch operand']
  #allocation3 [shape = 'f32[8,32]{1,0:T(8,128)}', space=vmem, size = 0x1000, scoped, tag = 'scratch operand']
  #allocation4 [shape = 'f32[8,32]{1,0:T(8,128)}', space=vmem, size = 0x1000, scoped, tag = 'scratch operand']
  %s0 = inlined_call_operand.hbm [shape: bf16[8,8,32], index: 0, kind: input, shape index: {}]
  %s1 = inlined_call_operand.hbm [shape: bf16[32,128], index: 1, kind: input, shape index: {}]
  %s2 = inlined_call_operand.hbm [shape: bf16[32,128], index: 2, kind: input, shape index: {}]
  %s3 = inlined_call_operand.vmem [shape: f32[1,128], index: 3, kind: input, shape index: {}]
  %s4 = inlined_call_operand.hbm [shape: f32[8,32], index: 4, kind: output, shape index: {}]
  %s5 = sld [smem:[#allocation0]]
  $region72: #{tpu_custom_call.1} parent=0
    _
  %s7 = ssub.s32 1, %s5
  %s8 = scalar_select 0, %s7, %s5
  $region1: #{tpu_custom_call.1} parent=0
    #allocation5 [shape = 'u8[16384]{0}', space=vmem, size = 0x4000, scoped, tag = 'input window, operand 0']
    #allocation6 [shape = 's32[2]{0}', space=sflag, size = 0x8, scoped, tag = 'scoped memory for tpu_custom_call.1']
    #allocation7 [shape = 's32[2]{0}', space=sflag, size = 0x8, scoped, tag = 'scoped memory for tpu_custom_call.1']
    #allocation8 [shape = 'u8[8192]{0}', space=vmem, size = 0x2000, scoped, tag = 'input window, operand 1, single buffered']
    #allocation9 [shape = 's32[1]{0}', space=sflag, size = 0x4, scoped, tag = 'scoped memory for tpu_custom_call.1']
    #allocation10 [shape = 'u8[8192]{0}', space=vmem, size = 0x2000, scoped, tag = 'input window, operand 2, single buffered']
    #allocation11 [shape = 'u8[4096]{0}', space=vmem, size = 0x1000, scoped, tag = 'output window, operand 0, single buffered']
    %9 = vsyncpa [#allocation6], 0
    %s10 = scalar_lea.sflag [#allocation6], 1
    %11 = vsyncpa %s10, 0
    %12 = vsyncpa [#allocation9], 0
    %13 = vsyncpa [#allocation7], 0
    loop: start=0, step=1, limit=4
    $region2: #{tpu_custom_call.1} parent=1 // loop_pre_header
      _
    $region3: #{tpu_custom_call.1} parent=1 // loop_header
      %s15 = sphi 0, %s19
      %p16 = scmp.ge.s32.totalorder %s15, 4
      %s22 = sphi 0, %s34
      %s23 = sphi 0, %s30
      %s24 = sphi 0, %s22
      %s25 = sphi 0, %s23
      %s26 = sphi 0, %s24
      %s27 = sphi 0, %s25
      %s39 = sphi 0, %s41
      %s42 = sphi 0, %s39
      %s43 = sphi 0, %s42
      %s59 = sphi 0, %s43
      %s63 = sphi 0, %s63
      %s65 = sphi 0, %s63
      %s66 = sphi 0, %s65
      %s80 = sphi 0, %s66
      %s84 = sphi 0, %s84
      %s86 = sphi 0, %s84
      %s87 = sphi 0, %s86
      %s101 = sphi 0, %s87
      %s105 = sphi 0, %s105
      %s107 = sphi 0, %s105
      %s108 = sphi 0, %s107
      %s122 = sphi 0, %s108
      %s128 = sphi 0, %s130
      %s131 = sphi 0, %s128
      %s132 = sphi 0, %s131
      %s148 = sphi 0, %s132
    $region4: #{tpu_custom_call.1} parent=1 // loop_header_branch
      %18 = sbr.rel (%p16) target = $region8
    $region5: #{tpu_custom_call.1} parent=1 // loop_body
      %s20 = ssub.s32 %s15, 1
      %s21 = ssub.s32 %s15, 2
      %s28 = sadd.s32 1, %s23
      %p29 = scmp.ge.s32.totalorder %s28, 2
      %s30 = scalar_select %p29, 0, %s28
      %s31 = sadd.s32 1, %s22
      %s32 = scalar_select %p29, %s31, %s22
      %p33 = scmp.ge.s32.totalorder %s32, 1
      %s34 = scalar_select %p33, 0, %s32
      %s35 = ssub.s32 %s23, %s30
      %s36 = ssub.s32 %s22, %s34
      %s37 = sor.u32 %s35, %s36
      %p38 = scmp.eq.s32.totalorder %s37, 0
      %s40 = sadd.s32 %s39, 1
      %s41 = scalar_select %p38, %s39, %s40
      %p44 = pneg %p38
      %p45 = scmp.eq.s32.totalorder %s15, 1
      %p46 = por %p44, %p45
      %p47 = scmp.ne.s32.totalorder %s39, %s42
      %p48 = scmp.eq.s32.totalorder %s15, 0
      %p49 = por %p47, %p48
      %p50 = scmp.ne.s32.totalorder %s39, %s42
      %p51 = scmp.eq.s32.totalorder %s20, 1
      %p52 = por %p50, %p51
      %p53 = scmp.ne.s32.totalorder %s42, %s43
      %p54 = scmp.eq.s32.totalorder %s20, 0
      %p55 = por %p53, %p54
      %p56 = scmp.ne.s32.totalorder %s42, %s43
      %p57 = scmp.eq.s32.totalorder %s21, 1
      %p58 = por %p56, %p57
      %p60 = scmp.ne.s32.totalorder %s43, %s59
      %p61 = scmp.eq.s32.totalorder %s21, 0
      %p62 = por %p60, %p61
      %s64 = sadd.s32 %s63, 1
      %p67 = scmp.eq.s32.totalorder %s15, 1
      %p68 = scmp.ne.s32.totalorder %s63, %s65
      %p69 = scmp.eq.s32.totalorder %s15, 0
      %p70 = por %p68, %p69
      %p71 = scmp.ne.s32.totalorder %s63, %s65
      %p72 = scmp.eq.s32.totalorder %s20, 1
      %p73 = por %p71, %p72
      %p74 = scmp.ne.s32.totalorder %s65, %s66
      %p75 = scmp.eq.s32.totalorder %s20, 0
      %p76 = por %p74, %p75
      %p77 = scmp.ne.s32.totalorder %s65, %s66
      %p78 = scmp.eq.s32.totalorder %s21, 1
      %p79 = por %p77, %p78
      %p81 = scmp.ne.s32.totalorder %s66, %s80
      %p82 = scmp.eq.s32.totalorder %s21, 0
      %p83 = por %p81, %p82
      %s85 = sadd.s32 %s84, 1
      %p88 = scmp.eq.s32.totalorder %s15, 1
      %p89 = scmp.ne.s32.totalorder %s84, %s86
      %p90 = scmp.eq.s32.totalorder %s15, 0
      %p91 = por %p89, %p90
      %p92 = scmp.ne.s32.totalorder %s84, %s86
      %p93 = scmp.eq.s32.totalorder %s20, 1
      %p94 = por %p92, %p93
      %p95 = scmp.ne.s32.totalorder %s86, %s87
      %p96 = scmp.eq.s32.totalorder %s20, 0
      %p97 = por %p95, %p96
      %p98 = scmp.ne.s32.totalorder %s86, %s87
      %p99 = scmp.eq.s32.totalorder %s21, 1
      %p100 = por %p98, %p99
      %p102 = scmp.ne.s32.totalorder %s87, %s101
      %p103 = scmp.eq.s32.totalorder %s21, 0
      %p104 = por %p102, %p103
      %s106 = sadd.s32 %s105, 1
      %p109 = scmp.eq.s32.totalorder %s15, 1
      %p110 = scmp.ne.s32.totalorder %s105, %s107
      %p111 = scmp.eq.s32.totalorder %s15, 0
      %p112 = por %p110, %p111
      %p113 = scmp.ne.s32.totalorder %s105, %s107
      %p114 = scmp.eq.s32.totalorder %s20, 1
      %p115 = por %p113, %p114
      %p116 = scmp.ne.s32.totalorder %s107, %s108
      %p117 = scmp.eq.s32.totalorder %s20, 0
      %p118 = por %p116, %p117
      %p119 = scmp.ne.s32.totalorder %s107, %s108
      %p120 = scmp.eq.s32.totalorder %s21, 1
      %p121 = por %p119, %p120
      %p123 = scmp.ne.s32.totalorder %s108, %s122
      %p124 = scmp.eq.s32.totalorder %s21, 0
      %p125 = por %p123, %p124
      %s126 = ssub.s32 %s22, %s34
      %p127 = scmp.eq.s32.totalorder %s126, 0
      %s129 = sadd.s32 %s128, 1
      %s130 = scalar_select %p127, %s128, %s129
      %p133 = pneg %p127
      %p134 = scmp.eq.s32.totalorder %s15, 1
      %p135 = por %p133, %p134
      %p136 = scmp.ne.s32.totalorder %s128, %s131
      %p137 = scmp.eq.s32.totalorder %s15, 0
      %p138 = por %p136, %p137
      %p139 = scmp.ne.s32.totalorder %s128, %s131
      %p140 = scmp.eq.s32.totalorder %s20, 1
      %p141 = por %p139, %p140
      %p142 = scmp.ne.s32.totalorder %s131, %s132
      %p143 = scmp.eq.s32.totalorder %s20, 0
      %p144 = por %p142, %p143
      %p145 = scmp.ne.s32.totalorder %s131, %s132
      %p146 = scmp.eq.s32.totalorder %s21, 1
      %p147 = por %p145, %p146
      %p149 = scmp.ne.s32.totalorder %s132, %s148
      %p150 = scmp.eq.s32.totalorder %s21, 0
      %p151 = por %p149, %p150
      %p152 = scmp.le.s32.totalorder 1, %s15
      %p153 = scmp.lt.s32.totalorder %s15, 3
      %p154 = pnand %p152, %p153
      %p155 = pneg %p154
      // Predicated region
      $region9: #{tpu_custom_call.1} parent=5 // pred_check
        _
      $region10: #{tpu_custom_call.1} parent=5 // pred_check_branch
        %157 = sbr.rel (%p154) target = $region12
      $region11: #{tpu_custom_call.1} parent=5 // pred_region
        %s158 = ssub.s32 %s15, 1
        // Predicated region
        $region13: #{tpu_custom_call.1} parent=11 // pred_check
          %p159 = pneg %p76
        $region14: #{tpu_custom_call.1} parent=11 // pred_check_branch
          %161 = sbr.rel (%p159) target = $region16
        $region15: #{tpu_custom_call.1} parent=11 // pred_region
          %163 = vsyncadd [#allocation9], 0
          %s164 = sshll.u32 %s1, 4
          %s165 = int_to_ptr.hbm [resolvable:$true] %s164
          %s166 = sshll.u32 [#allocation8], 4
          %s167 = int_to_ptr.vmem [resolvable:$true] %s166
          %172 = dma.hbm_to_vmem [thread:$0]  %s165, 256, %s167, [#allocation9], 64, 64, 4
        $region16: #{tpu_custom_call.1} parent=11 // pred_fallthru
          _
        // Predicated region
        $region17: #{tpu_custom_call.1} parent=11 // pred_check
          %p173 = pneg %p97
        $region18: #{tpu_custom_call.1} parent=11 // pred_check_branch
          %175 = sbr.rel (%p173) target = $region20
        $region19: #{tpu_custom_call.1} parent=11 // pred_region
          %177 = vsyncadd [#allocation9], 0
          %s178 = sshll.u32 %s2, 4
          %s179 = int_to_ptr.hbm [resolvable:$true] %s178
          %s180 = sshll.u32 [#allocation10], 4
          %s181 = int_to_ptr.vmem [resolvable:$true] %s180
          %186 = dma.hbm_to_vmem [thread:$0]  %s179, 256, %s181, [#allocation9], 64, 64, 4
        $region20: #{tpu_custom_call.1} parent=11 // pred_fallthru
          _
        // Predicated region
        $region21: #{tpu_custom_call.1} parent=11 // pred_check
          %p187 = pneg %p118
        $region22: #{tpu_custom_call.1} parent=11 // pred_check_branch
          %189 = sbr.rel (%p187) target = $region24
        $region23: #{tpu_custom_call.1} parent=11 // pred_region
          _
        $region24: #{tpu_custom_call.1} parent=11 // pred_fallthru
          _
      $region12: #{tpu_custom_call.1} parent=5 // pred_fallthru
        _
      %p190 = scmp.lt.s32.totalorder %s15, 2
      // Predicated region
      $region25: #{tpu_custom_call.1} parent=5 // pred_check
        %p191 = pneg %p190
      $region26: #{tpu_custom_call.1} parent=5 // pred_check_branch
        %193 = sbr.rel (%p191) target = $region28
      $region27: #{tpu_custom_call.1} parent=5 // pred_region
        // Predicated region
        $region29: #{tpu_custom_call.1} parent=27 // pred_check
          %p194 = pneg %p49
        $region30: #{tpu_custom_call.1} parent=27 // pred_check_branch
          %196 = sbr.rel (%p194) target = $region32
        $region31: #{tpu_custom_call.1} parent=27 // pred_region
          %s197 = sand.u32 %s39, 1
          %s198 = scalar_lea.sflag [#allocation6], %s197
          %s199 = sand.u32 %s39, 1
          %s200 = smul.addr %s199, 16
          %s201 = scalar_lea.vmem [#allocation5], %s200
          %s202 = smul.u32 4, %s23
          %204 = vsyncadd %s198, 0
          %s205 = sadd.s32 %s22, %s202
          %s206 = smul.addr %s205, 4
          %s207 = scalar_lea.hbm %s0, %s206
          %s208 = sshll.u32 %s207, 4
          %s209 = int_to_ptr.hbm [resolvable:$true] %s208
          %s210 = sshll.u32 %s201, 4
          %s211 = int_to_ptr.vmem [resolvable:$true] %s210
          %216 = dma.hbm_to_vmem [thread:$0]  %s209, 256, %s211, %s198, 64, 64, 4
        $region32: #{tpu_custom_call.1} parent=27 // pred_fallthru
          _
      $region28: #{tpu_custom_call.1} parent=5 // pred_fallthru
        _
      %p217 = scmp.le.s32.totalorder 1, %s15
      %p218 = scmp.lt.s32.totalorder %s15, 3
      %p219 = pnand %p217, %p218
      %p220 = pneg %p219
      // Predicated region
      $region33: #{tpu_custom_call.1} parent=5 // pred_check
        _
      $region34: #{tpu_custom_call.1} parent=5 // pred_check_branch
        %222 = sbr.rel (%p219) target = $region36
      $region35: #{tpu_custom_call.1} parent=5 // pred_region
        %s223 = ssub.s32 %s15, 1
        %s224 = sand.u32 %s42, 1
        %s225 = scalar_lea.sflag [#allocation6], %s224
        %s226 = sand.u32 %s42, 1
        %s227 = smul.addr %s226, 16
        %s228 = scalar_lea.vmem [#allocation5], %s227
        // Predicated region
        $region37: #{tpu_custom_call.1} parent=35 // pred_check
          %p229 = pneg %p55
        $region38: #{tpu_custom_call.1} parent=35 // pred_check_branch
          %231 = sbr.rel (%p229) target = $region40
        $region39: #{tpu_custom_call.1} parent=35 // pred_region
          %233 = dma.done %s225, 256
        $region40: #{tpu_custom_call.1} parent=35 // pred_fallthru
          _
        // Predicated region
        $region41: #{tpu_custom_call.1} parent=35 // pred_check
          %p234 = pneg %p76
        $region42: #{tpu_custom_call.1} parent=35 // pred_check_branch
          %236 = sbr.rel (%p234) target = $region44
        $region43: #{tpu_custom_call.1} parent=35 // pred_region
          %238 = dma.done [#allocation9], 256
        $region44: #{tpu_custom_call.1} parent=35 // pred_fallthru
          _
        // Predicated region
        $region45: #{tpu_custom_call.1} parent=35 // pred_check
          %p239 = pneg %p97
        $region46: #{tpu_custom_call.1} parent=35 // pred_check_branch
          %241 = sbr.rel (%p239) target = $region48
        $region47: #{tpu_custom_call.1} parent=35 // pred_region
          %243 = dma.done [#allocation9], 256
        $region48: #{tpu_custom_call.1} parent=35 // pred_fallthru
          _
        %s244 = sand.u32 %s42, 1
        %s245 = scalar_lea.sflag [#allocation6], %s244
        %s246 = sand.u32 %s42, 1
        %s247 = smul.addr %s246, 16
        %s248 = scalar_lea.vmem [#allocation5], %s247
        %p249 = pneg %p55
        %p250 = pneg %p52
        %p251 = pneg %p76
        %p252 = pneg %p73
        %p253 = pneg %p97
        %p254 = pneg %p94
        %p255 = pneg %p118
        %p256 = pneg %p115
        %p257 = pneg %p144
        %p258 = pneg %p141
        %s259 = smul.u32 4, %s25
        %p261 = scmp.eq.s32.totalorder %s25, 0
        // Predicated region
        $region49: #{tpu_custom_call.1} parent=35 // pred_check
          %p262 = pneg %p261
        $region50: #{tpu_custom_call.1} parent=35 // pred_check_branch
          %264 = sbr.rel (%p262) target = $region52
        $region51: #{tpu_custom_call.1} parent=35 // pred_region
          %vm265 = vcmask 261120
          %266 = vst.msk [vmem:[#allocation3] sm:$0xff] %vm265, 0.0
          %267 = vst.msk [vmem:[#allocation4] sm:$0xff] %vm265, 0.0
        $region52: #{tpu_custom_call.1} parent=35 // pred_fallthru
          _
        %v268 = vld [vmem:[#allocation8] sm:$0xf]
        %v269 = vld [vmem:[#allocation8 + $0x4] sm:$0xf]
        %v270 = vld [vmem:[#allocation8 + $0x8] sm:$0xf]
        %v271 = vld [vmem:[#allocation8 + $0xc] sm:$0xf]
        %v272 = vld [vmem:[#allocation10] sm:$0xf]
        %v273 = vld [vmem:[#allocation10 + $0x4] sm:$0xf]
        %v274 = vld [vmem:[#allocation10 + $0x8] sm:$0xf]
        %v275 = vld [vmem:[#allocation10 + $0xc] sm:$0xf]
        %v276 = vld [vmem:[%s3] sm:$0x1]
        %v277 = vlaneseq
        %v278 = vand.u32 %v277, 127
        %vm279 = vcmp.ge.s32.totalorder %v278, 64
        %vm280 = vcmp.lt.s32.totalorder %v278, 96
        %vm281 = vmand %vm279, %vm280
        %v282 = vsel %vm281, 1.0, 0.5
        %v283 = vsel %vm281, 0.0, 0.5
        loop: start=0, step=1, limit=4
        $region53: #{tpu_custom_call.1} parent=35 // loop_pre_header
          _
        $region54: #{tpu_custom_call.1} parent=35 // loop_header
          %s285 = sphi 0, %s289
          %p286 = scmp.ge.s32.totalorder %s285, 4
        $region55: #{tpu_custom_call.1} parent=35 // loop_header_branch
          %288 = sbr.rel (%p286) target = $region59
        $region56: #{tpu_custom_call.1} parent=35 // loop_body
          %s290 = smul.addr %s285, 4
          %s291 = scalar_lea.vmem %s228, %s290 [#allocation5]
          %v292 = vld [vmem:[%s291] sm:$0xf]
          %v294 = vperm.slane %v276, 0
          %v300 = vunpack.c.l.b16 %v268
          %v301 = vunpack.c.l.b16 %v269
          %v302 = vunpack.c.l.b16 %v270
          %v303 = vunpack.c.l.b16 %v271
          %v304 = vpack.c.b16 %v301, %v300
          %v305 = vpack.c.b16 %v303, %v302
          %vm308 = vcmask 261120
          %v310 = vsel %vm308, %v292, 0
          %312 = vmatpush.bf16.msra.mxu0 0
          %313 = vmatpush.bf16.msra.mxu0 0
          %314 = vmatpush.bf16.msra.mxu0 0
          %315 = vmatpush.bf16.msra.mxu0 0
          %316 = vmatpush.bf16.msra.mxu0 0
          %317 = vmatpush.bf16.msra.mxu0 0
          %318 = vmatpush.bf16.msra.mxu0 %v305
          %319 = vmatpush.bf16.msra.mxu0 %v304
          %320 = vmatmul.bf16.gmra.mxu0 %v310
          %v321 = vpop.f32.mrf.mxu0
          %v322 = vadd.f32 %v294, %v321
          %v323 = vpop.f32.mrf.mxu0
          %324 = vdwg.mxu0
          %s325 = smul.u32 %s285, 8
          %s326 = scalar_lea.vmem [#allocation2], %s325
          %327 = vst [vmem:[%s326] sm:$0xff] %v322
        $region57: #{tpu_custom_call.1} parent=35 // loop_footer
          %s289 = sadd.s32 1, %s285
        $region58: #{tpu_custom_call.1} parent=35 // loop_footer_branch
          %284 = sbr.rel target = $region54
        $region59: #{tpu_custom_call.1} parent=35 // loop_exit
          _
        %v328 = vld [vmem:[#allocation3] sm:$0xff]
        %v329 = vld [vmem:[#allocation4] sm:$0xff]
        %v330 = vld [vmem:[#allocation2] sm:$0xff]
        %v331 = vpack.c.bf16 %v328, %v328
        %v336 = vunpack.c.l.b16 %v272
        %v337 = vunpack.c.l.b16 %v273
        %v338 = vunpack.c.l.b16 %v274
        %v339 = vunpack.c.l.b16 %v275
        %v340 = vpack.c.b16 %v337, %v336
        %v341 = vpack.c.b16 %v339, %v338
        %vm344 = vcmask 261120
        %v346 = vsel %vm344, %v331, 0
        %348 = vmatpush.bf16.msra.mxu0 0
        %349 = vmatpush.bf16.msra.mxu0 0
        %350 = vmatpush.bf16.msra.mxu0 0
        %351 = vmatpush.bf16.msra.mxu0 0
        %352 = vmatpush.bf16.msra.mxu0 0
        %353 = vmatpush.bf16.msra.mxu0 0
        %354 = vmatpush.bf16.msra.mxu0 %v341
        %355 = vmatpush.bf16.msra.mxu0 %v340
        %356 = vmatmul.bf16.gmra.mxu0 %v346
        %v357 = vpop.f32.mrf.mxu0
        %v358 = vadd.f32 0.0, %v357
        %v359 = vpop.f32.mrf.mxu0
        %360 = vdwg.mxu0
        %v361 = vadd.f32 %v330, %v358
        %v362 = vmul.f32 %v361, %v282
        %v363 = vtanh.pop %v362
        %v364 = vmul.f32 %v363, %v282
        %v365 = vadd.f32 %v364, %v283
        %367 = vrot.lane.b32.xlu0 %v329, 32
        %v368 = vpop.permute.xlu0 %367
        %v370 = vmul.f32 %v365, %v368
        %372 = vrot.lane.b32.xlu0 %v365, 64
        %v373 = vpop.permute.xlu0 %372
        %v375 = vmul.f32 %v365, %v373
        %377 = vrot.lane.b32.xlu0 %v375, 32
        %v378 = vpop.permute.xlu0 %377
        %v380 = vadd.f32 %v370, %v378
        %v381 = vtanh.pop %v380
        %383 = vrot.lane.b32.xlu0 %v381, 64
        %v384 = vpop.permute.xlu0 %383
        %v386 = vmul.f32 %v365, %v384
        %s387 = scalar_lea.vmem [#allocation2], 8
        %v388 = vld [vmem:[%s387] sm:$0xff]
        %v389 = vpack.c.bf16 %v386, %v386
        %391 = vrot.lane.b32.xlu0 %v389, 32
        %v392 = vpop.permute.xlu0 %391
        %v394 = vsel %vm344, %v392, 0
        %396 = vmatpush.bf16.msra.mxu0 0
        %397 = vmatpush.bf16.msra.mxu0 0
        %398 = vmatpush.bf16.msra.mxu0 0
        %399 = vmatpush.bf16.msra.mxu0 0
        %400 = vmatpush.bf16.msra.mxu0 0
        %401 = vmatpush.bf16.msra.mxu0 0
        %402 = vmatpush.bf16.msra.mxu0 %v341
        %403 = vmatpush.bf16.msra.mxu0 %v340
        %404 = vmatmul.bf16.gmra.mxu0 %v394
        %v405 = vpop.f32.mrf.mxu0
        %v406 = vadd.f32 0.0, %v405
        %v407 = vpop.f32.mrf.mxu0
        %408 = vdwg.mxu0
        %v409 = vadd.f32 %v388, %v406
        %v410 = vmul.f32 %v409, %v282
        %v411 = vtanh.pop %v410
        %v412 = vmul.f32 %v411, %v282
        %v413 = vadd.f32 %v412, %v283
        %v414 = vmul.f32 %v413, %v380
        %416 = vrot.lane.b32.xlu0 %v413, 64
        %v417 = vpop.permute.xlu0 %416
        %v419 = vmul.f32 %v413, %v417
        %421 = vrot.lane.b32.xlu0 %v419, 32
        %v422 = vpop.permute.xlu0 %421
        %v424 = vadd.f32 %v414, %v422
        %v425 = vtanh.pop %v424
        %427 = vrot.lane.b32.xlu0 %v425, 64
        %v428 = vpop.permute.xlu0 %427
        %v430 = vmul.f32 %v413, %v428
        %s431 = scalar_lea.vmem [#allocation2], 16
        %v432 = vld [vmem:[%s431] sm:$0xff]
        %v433 = vpack.c.bf16 %v430, %v430
        %435 = vrot.lane.b32.xlu0 %v433, 32
        %v436 = vpop.permute.xlu0 %435
        %v438 = vsel %vm344, %v436, 0
        %440 = vmatpush.bf16.msra.mxu0 0
        %441 = vmatpush.bf16.msra.mxu0 0
        %442 = vmatpush.bf16.msra.mxu0 0
        %443 = vmatpush.bf16.msra.mxu0 0
        %444 = vmatpush.bf16.msra.mxu0 0
        %445 = vmatpush.bf16.msra.mxu0 0
        %446 = vmatpush.bf16.msra.mxu0 %v341
        %447 = vmatpush.bf16.msra.mxu0 %v340
        %448 = vmatmul.bf16.gmra.mxu0 %v438
        %v449 = vpop.f32.mrf.mxu0
        %v450 = vadd.f32 0.0, %v449
        %v451 = vpop.f32.mrf.mxu0
        %452 = vdwg.mxu0
        %v453 = vadd.f32 %v432, %v450
        %v454 = vmul.f32 %v453, %v282
        %v455 = vtanh.pop %v454
        %v456 = vmul.f32 %v455, %v282
        %v457 = vadd.f32 %v456, %v283
        %v458 = vmul.f32 %v457, %v424
        %460 = vrot.lane.b32.xlu0 %v457, 64
        %v461 = vpop.permute.xlu0 %460
        %v463 = vmul.f32 %v457, %v461
        %465 = vrot.lane.b32.xlu0 %v463, 32
        %v466 = vpop.permute.xlu0 %465
        %v468 = vadd.f32 %v458, %v466
        %v469 = vtanh.pop %v468
        %471 = vrot.lane.b32.xlu0 %v469, 64
        %v472 = vpop.permute.xlu0 %471
        %v474 = vmul.f32 %v457, %v472
        %s475 = scalar_lea.vmem [#allocation2], 24
        %v476 = vld [vmem:[%s475] sm:$0xff]
        %v477 = vpack.c.bf16 %v474, %v474
        %479 = vrot.lane.b32.xlu0 %v477, 32
        %v480 = vpop.permute.xlu0 %479
        %v482 = vsel %vm344, %v480, 0
        %484 = vmatpush.bf16.msra.mxu0 0
        %485 = vmatpush.bf16.msra.mxu0 0
        %486 = vmatpush.bf16.msra.mxu0 0
        %487 = vmatpush.bf16.msra.mxu0 0
        %488 = vmatpush.bf16.msra.mxu0 0
        %489 = vmatpush.bf16.msra.mxu0 0
        %490 = vmatpush.bf16.msra.mxu0 %v341
        %491 = vmatpush.bf16.msra.mxu0 %v340
        %492 = vmatmul.bf16.gmra.mxu0 %v482
        %v493 = vpop.f32.mrf.mxu0
        %v494 = vadd.f32 0.0, %v493
        %v495 = vpop.f32.mrf.mxu0
        %496 = vdwg.mxu0
        %v497 = vadd.f32 %v476, %v494
        %v498 = vmul.f32 %v497, %v282
        %v499 = vtanh.pop %v498
        %v500 = vmul.f32 %v499, %v282
        %v501 = vadd.f32 %v500, %v283
        %v502 = vmul.f32 %v501, %v468
        %504 = vrot.lane.b32.xlu0 %v501, 64
        %v505 = vpop.permute.xlu0 %504
        %v507 = vmul.f32 %v501, %v505
        %509 = vrot.lane.b32.xlu0 %v507, 32
        %v510 = vpop.permute.xlu0 %509
        %v512 = vadd.f32 %v502, %v510
        %v513 = vtanh.pop %v512
        %515 = vrot.lane.b32.xlu0 %v513, 64
        %v516 = vpop.permute.xlu0 %515
        %v518 = vmul.f32 %v501, %v516
        %520 = vrot.lane.b32.xlu0 %v518, 32
        %v521 = vpop.permute.xlu0 %520
        %523 = vst.msk [vmem:[#allocation3] sm:$0xff] %vm344, %v521
        %525 = vrot.lane.b32.xlu0 %v512, 96
        %v526 = vpop.permute.xlu0 %525
        %528 = vst.msk [vmem:[#allocation4] sm:$0xff] %vm344, %v526
        %529 = vst.msk [vmem:[#allocation11] sm:$0xff] %vm344, %v521
        // Predicated region
        $region60: #{tpu_custom_call.1} parent=35 // pred_check
          %p530 = pneg %p141
        $region61: #{tpu_custom_call.1} parent=35 // pred_check_branch
          %532 = sbr.rel (%p530) target = $region63
        $region62: #{tpu_custom_call.1} parent=35 // pred_region
          %534 = vsyncadd [#allocation7], 0
          %s535 = smul.addr %s24, 8
          %s536 = scalar_lea.hbm %s4, %s535
          %s538 = sshll.u32 [#allocation11], 4
          %s539 = int_to_ptr.vmem [resolvable:$true] %s538
          %s540 = sshll.u32 %s536, 4
          %s541 = int_to_ptr.hbm [resolvable:$true] %s540
          %543 = dma.vmem_to_hbm [thread:$0]  %s539, 128, %s541, [#allocation7]
        $region63: #{tpu_custom_call.1} parent=35 // pred_fallthru
          _
        // Predicated region
        $region64: #{tpu_custom_call.1} parent=35 // pred_check
          %p544 = pneg %p141
        $region65: #{tpu_custom_call.1} parent=35 // pred_check_branch
          %546 = sbr.rel (%p544) target = $region67
        $region66: #{tpu_custom_call.1} parent=35 // pred_region
          %548 = dma.done [#allocation7], 128
        $region67: #{tpu_custom_call.1} parent=35 // pred_fallthru
          _
      $region36: #{tpu_custom_call.1} parent=5 // pred_fallthru
        _
      %p549 = scmp.le.s32.totalorder 2, %s15
      // Predicated region
      $region68: #{tpu_custom_call.1} parent=5 // pred_check
        %p550 = pneg %p549
      $region69: #{tpu_custom_call.1} parent=5 // pred_check_branch
        %552 = sbr.rel (%p550) target = $region71
      $region70: #{tpu_custom_call.1} parent=5 // pred_region
        %s553 = ssub.s32 %s15, 2
      $region71: #{tpu_custom_call.1} parent=5 // pred_fallthru
        _
    $region6: #{tpu_custom_call.1} parent=1 // loop_footer
      %s19 = sadd.s32 1, %s15
    $region7: #{tpu_custom_call.1} parent=1 // loop_footer_branch
      %14 = sbr.rel target = $region3
    $region8: #{tpu_custom_call.1} parent=1 // loop_exit
      _
    %554 = vsyncpa [#allocation6], 1
    %s555 = scalar_lea.sflag [#allocation6], 1
    %556 = vsyncpa %s555, 1
    %557 = vsyncpa [#allocation9], 1
    %558 = vsyncpa [#allocation7], 1
    %s559 = scalar_lea.sflag [#allocation7], 1
    %560 = vsyncpa %s559, 1

</llo_original>
